<compile_context>
chip_gen: v5e
topology: v5e:2x2
jax: 0.10.0
libtpu: 0.0.40
codegen_flags: <defaults>
</compile_context>

<pallas_src>
import functools
import math

import jax
import jax.numpy as jnp
from jax.experimental import pallas as pl
from jax.experimental.pallas import tpu as pltpu


def _time_reg_kernel(x_ref, o_ref, acc_ref, *, weight, decay_factor,
                     total_t, t_block):
    """Coefficient-weighted reduction over one (t_block, d_block) tile (MXU)."""
    t = pl.program_id(1)

    @pl.when(t == 0)
    def _():
        acc_ref[...] = jnp.zeros_like(acc_ref)

    # Lane-major coefficient row (1, tb) built in-kernel: no extra HBM input
    # and lane-dense vregs (tb/128 vregs instead of tb/8 lane-sparse ones).
    row = jax.lax.broadcasted_iota(jnp.int32, (1, t_block), 1) + t * t_block
    # Exponent (T-2-j), clamped >= 0 so the (overridden) last row and any
    # zero-padded rows never see a negative power; exp() lands on the EUP.
    expo = jnp.maximum((total_t - 2) - row, 0).astype(jnp.float32)
    log1m = math.log(1.0 - decay_factor)
    pw = jnp.exp(expo * log1m)                       # (1 - decay)^(T-2-j)
    # `weight` folded into the coefficients -> no separate epilogue multiply.
    # Padded rows (row >= total_t) multiply zero data, so no extra mask needed.
    coef = jnp.where(row == total_t - 1, weight, -weight * pw)

    x = x_ref[...]
    if jnp.issubdtype(x.dtype, jnp.floating):
        if x.dtype != jnp.float32:
            coef = coef.astype(x.dtype)              # e.g. bf16 x bf16 on MXU
    else:
        x = x.astype(jnp.float32)                    # fallback for int inputs

    # (1, tb) @ (tb, db) -> (1, db): multiply+reduce on the MXU, f32 accumulate.
    acc_ref[...] += jnp.dot(coef, x, preferred_element_type=jnp.float32)

    @pl.when(t == pl.num_programs(1) - 1)
    def _():
        o_ref[...] = acc_ref[...].astype(o_ref.dtype)


def _largest_divisor_multiple(total, quantum, cap):
    """Largest multiple of `quantum` dividing `total`, capped at `cap` (0 if none)."""
    b = min(cap, total)
    b -= b % quantum
    while b >= quantum:
        if total % b == 0:
            return b
        b -= quantum
    return 0


def time_regularizer(factors, *, weight=0.01, decay_factor=0.1,
                     t_block=None, d_block=None):
    """JAX/Pallas equivalent of TimeRegularizer(weight, norm=None) with an
    exponential-decay time_regularize.  Returns shape (1, D)."""
    T, D = factors.shape
    assert T >= 2, "need at least two time factors"
    assert 0.0 <= decay_factor < 1.0

    # TODO(synk): the tkbc `norm` regularizer (e.g. N3) is a separate module
    # passed at construction time; with norm=None the identity path is used.

    itemsize = jnp.dtype(factors.dtype).itemsize
    # dtype-aware sublane quantum: sub-32-bit dtypes pack along sublanes.
    qt = {4: 8, 2: 16, 1: 32}.get(itemsize, 8)

    # Zero-pad T up to the quantum so the reduction axis always streams in
    # well-formed tiles.  Padded rows contribute exactly 0 (their data is 0).
    t_pad = ((T + qt - 1) // qt) * qt
    x = factors
    if t_pad != T:
        x = jnp.pad(factors, ((0, t_pad - T), (0, 0)))

    # --- tile selection by byte budget (~4 MiB per input buffer) ---
    if t_block is not None:
        tb = t_block
    else:
        tb = _largest_divisor_multiple(t_pad, qt, 512) or t_pad

    if d_block is not None:
        db = d_block
    else:
        if D % 128 == 0:
            budget_lanes = (4 * 1024 * 1024) // max(tb * itemsize, 1)
            cap = min(D, 2048, max(128, (budget_lanes // 128) * 128))
            if D >= 256:
                # Keep >=2 blocks along the parallel D axis (v7x has 2 TCs).
                cap = min(cap, max(128, (D // 2 // 128) * 128))
            db = _largest_divisor_multiple(D, 128, cap) or D
        else:
            db = D                                   # full extent is always legal
    assert t_pad % tb == 0 and D % db == 0

    grid = (D // db, t_pad // tb)                    # reduction axis (T) last

    kernel = functools.partial(
        _time_reg_kernel, weight=float(weight),
        decay_factor=float(decay_factor), total_t=T, t_block=tb)

    cost = pl.CostEstimate(
        flops=2 * t_pad * D,
        transcendentals=t_pad * (D // db),
        bytes_accessed=t_pad * D * itemsize + D * itemsize)

    return pl.pallas_call(
        kernel,
        out_shape=jax.ShapeDtypeStruct((1, D), factors.dtype),
        grid_spec=pltpu.PrefetchScalarGridSpec(
            num_scalar_prefetch=0,
            grid=grid,
            in_specs=[pl.BlockSpec((tb, db), lambda d, t: (t, d))],
            out_specs=pl.BlockSpec((1, db), lambda d, t: (0, d)),
            scratch_shapes=[pltpu.VMEM((1, db), jnp.float32)]),
        compiler_params=pltpu.CompilerParams(
            dimension_semantics=("parallel", "arbitrary"),
            vmem_limit_bytes=32 * 1024 * 1024),
        cost_estimate=cost,
    )(x)


def _reference(factors, *, weight=0.01, decay_factor=0.1):
    T = factors.shape[0]
    factor = factors[T - 1]
    aux = [factors[j] * (1.0 - decay_factor) ** (T - 2 - j)
           for j in range(T - 2, -1, -1)]
    past_contrib = jnp.sum(jnp.stack(aux), axis=0)
    diff = jnp.stack([factor - past_contrib])
    # TimeRegularizer.forward divides by (T-1); the exp-decay time_regularize
    # multiplies it back, so the net is weight * diff.
    return weight * diff / (T - 1) * (T - 1)


if __name__ == "__main__":
    key = jax.random.PRNGKey(0)
    T, D = 48, 256                 # num time factors, embedding rank (lane-dense)
    factors = jax.random.normal(key, (T, D), dtype=jnp.float32)

    weight = 0.01
    decay_factor = 0.1

    # Small explicit tiles so the demo exercises multiple T steps (accumulator
    # init/finalize) and multiple D blocks (parallel axis / v7x TC sharding).
    out = time_regularizer(factors, weight=weight, decay_factor=decay_factor,
                           t_block=16, d_block=128)
    out = jax.block_until_ready(out)

    ref = _reference(factors, weight=weight, decay_factor=decay_factor)
    assert out.shape == (1, D)
    assert jnp.allclose(out, ref, atol=1e-5, rtol=1e-5)

    # Also exercise the automatic byte-budget tile selection path.
    out_auto = jax.block_until_ready(
        time_regularizer(factors, weight=weight, decay_factor=decay_factor))
    assert jnp.allclose(out_auto, ref, atol=1e-5, rtol=1e-5)

    print("KERNEL_OK")
</pallas_src>

<mosaic_0001>
module attributes {stable_mosaic.version = 11 : i64} {
  func.func @_time_reg_kernel(%arg0: i32, %arg1: i32, %arg2: memref<16x128xf32, #tpu.memory_space<vmem>>, %arg3: memref<1x128xf32, #tpu.memory_space<vmem>>, %arg4: memref<1x128xf32, #tpu.memory_space<vmem>>) attributes {dimension_semantics = [#tpu.dimension_semantics<parallel>, #tpu.dimension_semantics<arbitrary>], iteration_bounds = array<i64: 2, 3>, scalar_prefetch = 0 : i64, scratch_operands = 1 : i64, tpu.core_type = #tpu.core_type<tc>, window_params = [{transform_indices = @transform_0, window_bounds = array<i64: 16, 128>}, {transform_indices = @transform_1, window_bounds = array<i64: 1, 128>}]} {
    %c0_i32 = arith.constant 0 : i32
    %0 = arith.cmpi eq, %arg1, %c0_i32 : i32
    %1 = arith.extui %0 : i1 to i32
    %c0_i32_0 = arith.constant 0 : i32
    %2 = arith.cmpi ne, %1, %c0_i32_0 : i32
    scf.if %2 {
      %cst_11 = arith.constant 0.000000e+00 : f32
      %29 = vector.broadcast %cst_11 : f32 to vector<1x128xf32>
      %c0_12 = arith.constant 0 : index
      %c0_13 = arith.constant 0 : index
      %30 = vector.load %arg4[%c0_12, %c0_13] : memref<1x128xf32, #tpu.memory_space<vmem>>, vector<1x128xf32>
      tpu.vector_store %arg4[%c0_12, %c0_13], %29 {strides = array<i32>} : memref<1x128xf32, #tpu.memory_space<vmem>>, vector<1x128xf32>,
    } else {
    }
    %3 = tpu.iota {dimensions = array<i32: 1>} : vector<1x16xi32>
    %c16_i32 = arith.constant 16 : i32
    %4 = arith.muli %arg1, %c16_i32 : i32
    %5 = vector.broadcast %4 : i32 to vector<1x16xi32>
    %6 = arith.addi %3, %5 : vector<1x16xi32>
    %c46_i32 = arith.constant 46 : i32
    %7 = vector.broadcast %c46_i32 : i32 to vector<1x16xi32>
    %8 = arith.subi %7, %6 : vector<1x16xi32>
    %c0_i32_1 = arith.constant 0 : i32
    %9 = vector.broadcast %c0_i32_1 : i32 to vector<1x16xi32>
    %10 = arith.maxsi %8, %9 : vector<1x16xi32>
    %11 = arith.sitofp %10 : vector<1x16xi32> to vector<1x16xf32>
    %cst = arith.constant -0.105360515 : f32
    %12 = vector.broadcast %cst : f32 to vector<1x16xf32>
    %13 = arith.mulf %11, %12 : vector<1x16xf32>
    %14 = math.exp %13 : vector<1x16xf32>
    %c47_i32 = arith.constant 47 : i32
    %15 = vector.broadcast %c47_i32 : i32 to vector<1x16xi32>
    %16 = arith.cmpi eq, %6, %15 : vector<1x16xi32>
    %cst_2 = arith.constant -0.00999999977 : f32
    %17 = vector.broadcast %cst_2 : f32 to vector<1x16xf32>
    %18 = arith.mulf %17, %14 : vector<1x16xf32>
    %cst_3 = arith.constant 0.00999999977 : f32
    %19 = vector.broadcast %cst_3 : f32 to vector<1x16xf32>
    %20 = arith.select %16, %19, %18 : vector<1x16xi1>, vector<1x16xf32>
    %c0 = arith.constant 0 : index
    %c0_4 = arith.constant 0 : index
    %21 = vector.load %arg2[%c0, %c0_4] : memref<16x128xf32, #tpu.memory_space<vmem>>, vector<16x128xf32>
    %c0_5 = arith.constant 0 : index
    %c0_6 = arith.constant 0 : index
    %22 = vector.load %arg4[%c0_5, %c0_6] : memref<1x128xf32, #tpu.memory_space<vmem>>, vector<1x128xf32>
    %cst_7 = arith.constant dense<0.000000e+00> : vector<1x128xf32>
    %23 = tpu.matmul %20, %21, %cst_7 {dimension_numbers = #tpu.dot_dimension_numbers<[1], [0], [0], [1], [0, 0, 1, 1], [], []>} : vector<1x16xf32>, vector<16x128xf32>, vector<1x128xf32> -> vector<1x128xf32>
    %24 = arith.addf %22, %23 : vector<1x128xf32>
    %c0_8 = arith.constant 0 : index
    %c0_9 = arith.constant 0 : index
    %25 = vector.load %arg4[%c0_8, %c0_9] : memref<1x128xf32, #tpu.memory_space<vmem>>, vector<1x128xf32>
    tpu.vector_store %arg4[%c0_8, %c0_9], %24 {strides = array<i32>} : memref<1x128xf32, #tpu.memory_space<vmem>>, vector<1x128xf32>,
    %c2_i32 = arith.constant 2 : i32
    %26 = arith.cmpi eq, %arg1, %c2_i32 : i32
    %27 = arith.extui %26 : i1 to i32
    %c0_i32_10 = arith.constant 0 : i32
    %28 = arith.cmpi ne, %27, %c0_i32_10 : i32
    scf.if %28 {
      %c0_11 = arith.constant 0 : index
      %c0_12 = arith.constant 0 : index
      %29 = vector.load %arg4[%c0_11, %c0_12] : memref<1x128xf32, #tpu.memory_space<vmem>>, vector<1x128xf32>
      %c0_13 = arith.constant 0 : index
      %c0_14 = arith.constant 0 : index
      %30 = vector.load %arg3[%c0_13, %c0_14] : memref<1x128xf32, #tpu.memory_space<vmem>>, vector<1x128xf32>
      tpu.vector_store %arg3[%c0_13, %c0_14], %29 {strides = array<i32>} : memref<1x128xf32, #tpu.memory_space<vmem>>, vector<1x128xf32>,
    } else {
    }
    return
  }
  func.func @transform_0(%arg0: i32, %arg1: i32) -> (i32, i32) {
    %c0_i32 = arith.constant 0 : i32
    return %arg1, %arg0 : i32, i32
  }
  func.func @transform_1(%arg0: i32, %arg1: i32) -> (i32, i32) {
    %c0_i32 = arith.constant 0 : i32
    %c0_i32_0 = arith.constant 0 : i32
    return %c0_i32, %arg0 : i32, i32
  }
}

</mosaic_0001>

<llo_original>
// kernel: tpu_custom_call.1
$region0: #{tpu_custom_call.1}
  #allocation0 [shape = 'u32[]', space=smem, size = 0x4, offset = 0x4, fixed_abs, tag = 'smem constant byte address 0x4 - core index']
  #allocation1 [shape = 'u32[72,128]{1,0:T(1,128)}', space=vmem, size = 0x9000, scoped, tag = 'internal scratch']
  #allocation2 [shape = 'f32[1,128]{1,0:T(1,128)}', space=vmem, size = 0x200, scoped, tag = 'scratch operand']
  %s0 = inlined_call_operand.hbm [shape: f32[48,256], index: 0, kind: input, shape index: {}]
  %s1 = inlined_call_operand.hbm [shape: f32[1,256], index: 1, kind: output, shape index: {}]
  %s2 = sld [smem:[#allocation0]]
  $region49: #{tpu_custom_call.1} parent=0
    _
  %s4 = ssub.s32 1, %s2
  %s5 = scalar_select 0, %s4, %s2
  $region1: #{tpu_custom_call.1} parent=0
    #allocation3 [shape = 'u8[16384]{0}', space=vmem, size = 0x4000, scoped, tag = 'input window, operand 0']
    #allocation4 [shape = 's32[2]{0}', space=sflag, size = 0x8, scoped, tag = 'scoped memory for tpu_custom_call.1']
    #allocation5 [shape = 's32[2]{0}', space=sflag, size = 0x8, scoped, tag = 'scoped memory for tpu_custom_call.1']
    #allocation6 [shape = 'u8[1024]{0}', space=vmem, size = 0x400, scoped, tag = 'output window, operand 0']
    %6 = vsyncpa [#allocation4], 0
    %s7 = scalar_lea.sflag [#allocation4], 1
    %8 = vsyncpa %s7, 0
    %9 = vsyncpa [#allocation5], 0
    %s10 = scalar_lea.sflag [#allocation5], 1
    %11 = vsyncpa %s10, 0
    loop: start=0, step=1, limit=8
    $region2: #{tpu_custom_call.1} parent=1 // loop_pre_header
      _
    $region3: #{tpu_custom_call.1} parent=1 // loop_header
      %s13 = sphi 0, %s17
      %p14 = scmp.ge.s32.totalorder %s13, 8
      %s20 = sphi 0, %s32
      %s21 = sphi 0, %s28
      %s22 = sphi 0, %s20
      %s23 = sphi 0, %s21
      %s24 = sphi 0, %s22
      %s25 = sphi 0, %s23
      %s37 = sphi 0, %s39
      %s40 = sphi 0, %s37
      %s41 = sphi 0, %s40
      %s57 = sphi 0, %s41
      %s63 = sphi 0, %s65
      %s66 = sphi 0, %s63
      %s67 = sphi 0, %s66
      %s83 = sphi 0, %s67
    $region4: #{tpu_custom_call.1} parent=1 // loop_header_branch
      %16 = sbr.rel (%p14) target = $region8
    $region5: #{tpu_custom_call.1} parent=1 // loop_body
      %s18 = ssub.s32 %s13, 1
      %s19 = ssub.s32 %s13, 2
      %s26 = sadd.s32 1, %s21
      %p27 = scmp.ge.s32.totalorder %s26, 3
      %s28 = scalar_select %p27, 0, %s26
      %s29 = sadd.s32 1, %s20
      %s30 = scalar_select %p27, %s29, %s20
      %p31 = scmp.ge.s32.totalorder %s30, 2
      %s32 = scalar_select %p31, 0, %s30
      %s33 = ssub.s32 %s21, %s28
      %s34 = ssub.s32 %s20, %s32
      %s35 = sor.u32 %s33, %s34
      %p36 = scmp.eq.s32.totalorder %s35, 0
      %s38 = sadd.s32 %s37, 1
      %s39 = scalar_select %p36, %s37, %s38
      %p42 = pneg %p36
      %p43 = scmp.eq.s32.totalorder %s13, 5
      %p44 = por %p42, %p43
      %p45 = scmp.ne.s32.totalorder %s37, %s40
      %p46 = scmp.eq.s32.totalorder %s13, 0
      %p47 = por %p45, %p46
      %p48 = scmp.ne.s32.totalorder %s37, %s40
      %p49 = scmp.eq.s32.totalorder %s18, 5
      %p50 = por %p48, %p49
      %p51 = scmp.ne.s32.totalorder %s40, %s41
      %p52 = scmp.eq.s32.totalorder %s18, 0
      %p53 = por %p51, %p52
      %p54 = scmp.ne.s32.totalorder %s40, %s41
      %p55 = scmp.eq.s32.totalorder %s19, 5
      %p56 = por %p54, %p55
      %p58 = scmp.ne.s32.totalorder %s41, %s57
      %p59 = scmp.eq.s32.totalorder %s19, 0
      %p60 = por %p58, %p59
      %s61 = ssub.s32 %s20, %s32
      %p62 = scmp.eq.s32.totalorder %s61, 0
      %s64 = sadd.s32 %s63, 1
      %s65 = scalar_select %p62, %s63, %s64
      %p68 = pneg %p62
      %p69 = scmp.eq.s32.totalorder %s13, 5
      %p70 = por %p68, %p69
      %p71 = scmp.ne.s32.totalorder %s63, %s66
      %p72 = scmp.eq.s32.totalorder %s13, 0
      %p73 = por %p71, %p72
      %p74 = scmp.ne.s32.totalorder %s63, %s66
      %p75 = scmp.eq.s32.totalorder %s18, 5
      %p76 = por %p74, %p75
      %p77 = scmp.ne.s32.totalorder %s66, %s67
      %p78 = scmp.eq.s32.totalorder %s18, 0
      %p79 = por %p77, %p78
      %p80 = scmp.ne.s32.totalorder %s66, %s67
      %p81 = scmp.eq.s32.totalorder %s19, 5
      %p82 = por %p80, %p81
      %p84 = scmp.ne.s32.totalorder %s67, %s83
      %p85 = scmp.eq.s32.totalorder %s19, 0
      %p86 = por %p84, %p85
      %p87 = scmp.le.s32.totalorder 1, %s13
      %p88 = scmp.lt.s32.totalorder %s13, 7
      %p89 = pnand %p87, %p88
      %p90 = pneg %p89
      // Predicated region
      $region9: #{tpu_custom_call.1} parent=5 // pred_check
        _
      $region10: #{tpu_custom_call.1} parent=5 // pred_check_branch
        %92 = sbr.rel (%p89) target = $region12
      $region11: #{tpu_custom_call.1} parent=5 // pred_region
        %s93 = ssub.s32 %s13, 1
      $region12: #{tpu_custom_call.1} parent=5 // pred_fallthru
        _
      %p94 = scmp.lt.s32.totalorder %s13, 6
      // Predicated region
      $region13: #{tpu_custom_call.1} parent=5 // pred_check
        %p95 = pneg %p94
      $region14: #{tpu_custom_call.1} parent=5 // pred_check_branch
        %97 = sbr.rel (%p95) target = $region16
      $region15: #{tpu_custom_call.1} parent=5 // pred_region
        // Predicated region
        $region17: #{tpu_custom_call.1} parent=15 // pred_check
          %p98 = pneg %p47
        $region18: #{tpu_custom_call.1} parent=15 // pred_check_branch
          %100 = sbr.rel (%p98) target = $region20
        $region19: #{tpu_custom_call.1} parent=15 // pred_region
          %s101 = sand.u32 %s37, 1
          %s102 = scalar_lea.sflag [#allocation4], %s101
          %s103 = sand.u32 %s37, 1
          %s104 = smul.addr %s103, 16
          %s105 = scalar_lea.vmem [#allocation3], %s104
          %s106 = smul.u32 2, %s21
          %108 = vsyncadd %s102, 0
          %s109 = smul.addr %s106, 2
          %s110 = sadd.s32 %s20, %s109
          %s111 = smul.addr %s110, 8
          %s112 = scalar_lea.hbm %s0, %s111
          %s113 = sshll.u32 %s112, 4
          %s114 = int_to_ptr.hbm [resolvable:$true] %s113
          %s115 = sshll.u32 %s105, 4
          %s116 = int_to_ptr.vmem [resolvable:$true] %s115
          %121 = dma.hbm_to_vmem [thread:$0]  %s114, 256, %s116, %s102, 256, 128, 8
        $region20: #{tpu_custom_call.1} parent=15 // pred_fallthru
          _
      $region16: #{tpu_custom_call.1} parent=5 // pred_fallthru
        _
      %p122 = scmp.le.s32.totalorder 1, %s13
      %p123 = scmp.lt.s32.totalorder %s13, 7
      %p124 = pnand %p122, %p123
      %p125 = pneg %p124
      // Predicated region
      $region21: #{tpu_custom_call.1} parent=5 // pred_check
        _
      $region22: #{tpu_custom_call.1} parent=5 // pred_check_branch
        %127 = sbr.rel (%p124) target = $region24
      $region23: #{tpu_custom_call.1} parent=5 // pred_region
        %s128 = ssub.s32 %s13, 1
        %s129 = sand.u32 %s40, 1
        %s130 = scalar_lea.sflag [#allocation4], %s129
        %s131 = sand.u32 %s40, 1
        %s132 = smul.addr %s131, 16
        %s133 = scalar_lea.vmem [#allocation3], %s132
        // Predicated region
        $region25: #{tpu_custom_call.1} parent=23 // pred_check
          %p134 = pneg %p53
        $region26: #{tpu_custom_call.1} parent=23 // pred_check_branch
          %136 = sbr.rel (%p134) target = $region28
        $region27: #{tpu_custom_call.1} parent=23 // pred_region
          %138 = dma.done %s130, 256
        $region28: #{tpu_custom_call.1} parent=23 // pred_fallthru
          _
        %s139 = sand.u32 %s40, 1
        %s140 = scalar_lea.sflag [#allocation4], %s139
        %s141 = sand.u32 %s40, 1
        %s142 = smul.addr %s141, 16
        %s143 = scalar_lea.vmem [#allocation3], %s142
        %p144 = pneg %p53
        %p145 = pneg %p50
        %p146 = pneg %p79
        %p147 = pneg %p76
        %s148 = sand.u32 %s66, 1
        %s149 = scalar_lea.sflag [#allocation5], %s148
        %s150 = sand.u32 %s66, 1
        %s151 = scalar_lea.vmem [#allocation6], %s150
        %s152 = smul.u32 2, %s23
        %p153 = scmp.eq.s32.totalorder %s23, 0
        // Predicated region
        $region29: #{tpu_custom_call.1} parent=23 // pred_check
          %p154 = pneg %p153
        $region30: #{tpu_custom_call.1} parent=23 // pred_check_branch
          %156 = sbr.rel (%p154) target = $region32
        $region31: #{tpu_custom_call.1} parent=23 // pred_region
          %157 = vst [vmem:[#allocation2] sm:$0x1] 0.0
        $region32: #{tpu_custom_call.1} parent=23 // pred_fallthru
          _
        %v158 = vlaneseq
        %v159 = vand.u32 %v158, 127
        %s160 = smul.u32 %s23, 16
        %v161 = vstv %s160
        %v162 = vadd.s32 %v159, %v161
        %v163 = vsub.s32 46, %v162
        %vm164 = vcmp.gt.s32.totalorder %v163, 0
        %v165 = vsel %vm164, %v163, 0
        %v166 = vcvt.s32.f32 %v165
        %v167 = vmul.f32 %v166, -0.105360515
        %v168 = vmul.f32 %v167, 1.442695
        %v169 = vpow.pop %v168
        %vm170 = vcmp.eq.s32.totalorder %v162, 47
        %v171 = vmul.f32 %v169, -0.01
        %v172 = vsel %vm170, 0.01, %v171
        %v173 = vld [vmem:[%s133] sm:$0xff]
        %v174 = vld [vmem:[%s133 + $0x8] sm:$0xff]
        %v175 = vld [vmem:[#allocation2] sm:$0x1]
        %vm176 = vcmask 130048
        %v178 = vsel %vm176, %v172, 0
        %180 = vmatpush.msra.mxu0 0.0
        %181 = vmatpush.msra.mxu0 0.0
        %182 = vmatpush.msra.mxu0 0.0
        %183 = vmatpush.msra.mxu0 0.0
        %184 = vmatpush.msra.mxu0 0.0
        %185 = vmatpush.msra.mxu0 0.0
        %186 = vmatpush.msra.mxu0 0.0
        %187 = vmatpush.msra.mxu0 0.0
        %188 = vmatpush.msra.mxu0 0.0
        %189 = vmatpush.msra.mxu0 0.0
        %190 = vmatpush.msra.mxu0 0.0
        %191 = vmatpush.msra.mxu0 0.0
        %192 = vmatpush.msra.mxu0 0.0
        %193 = vmatpush.msra.mxu0 0.0
        %194 = vmatpush.msra.mxu0 %v174
        %195 = vmatpush.msra.mxu0 %v173
        %196 = vmatmul.f32.gmra.mxu0 %v178
        %v197 = vpop.f32.mrf.mxu0
        %v198 = vadd.f32 0.0, %v197
        %199 = vdwg.mxu0
        %v200 = vadd.f32 %v175, %v198
        %201 = vst [vmem:[#allocation2] sm:$0x1] %v200
        %p202 = scmp.eq.s32.totalorder %s23, 2
        // Predicated region
        $region33: #{tpu_custom_call.1} parent=23 // pred_check
          %p203 = pneg %p202
        $region34: #{tpu_custom_call.1} parent=23 // pred_check_branch
          %205 = sbr.rel (%p203) target = $region36
        $region35: #{tpu_custom_call.1} parent=23 // pred_region
          %v206 = vld [vmem:[#allocation2] sm:$0x1]
          %207 = vst [vmem:[%s151] sm:$0x1] %v206
        $region36: #{tpu_custom_call.1} parent=23 // pred_fallthru
          _
        %s208 = sand.u32 %s66, 1
        %s209 = scalar_lea.sflag [#allocation5], %s208
        %s210 = sand.u32 %s66, 1
        %s211 = scalar_lea.vmem [#allocation6], %s210
        // Predicated region
        $region37: #{tpu_custom_call.1} parent=23 // pred_check
          %p212 = pneg %p76
        $region38: #{tpu_custom_call.1} parent=23 // pred_check_branch
          %214 = sbr.rel (%p212) target = $region40
        $region39: #{tpu_custom_call.1} parent=23 // pred_region
          %216 = vsyncadd %s209, 0
          %s217 = scalar_lea.hbm %s1, %s22
          %s219 = sshll.u32 %s211, 4
          %s220 = int_to_ptr.vmem [resolvable:$true] %s219
          %s221 = sshll.u32 %s217, 4
          %s222 = int_to_ptr.hbm [resolvable:$true] %s221
          %224 = dma.vmem_to_hbm [thread:$0]  %s220, 16, %s222, %s209
        $region40: #{tpu_custom_call.1} parent=23 // pred_fallthru
          _
      $region24: #{tpu_custom_call.1} parent=5 // pred_fallthru
        _
      %p225 = scmp.le.s32.totalorder 2, %s13
      // Predicated region
      $region41: #{tpu_custom_call.1} parent=5 // pred_check
        %p226 = pneg %p225
      $region42: #{tpu_custom_call.1} parent=5 // pred_check_branch
        %228 = sbr.rel (%p226) target = $region44
      $region43: #{tpu_custom_call.1} parent=5 // pred_region
        %s229 = ssub.s32 %s13, 2
        // Predicated region
        $region45: #{tpu_custom_call.1} parent=43 // pred_check
          %p230 = pneg %p82
        $region46: #{tpu_custom_call.1} parent=43 // pred_check_branch
          %232 = sbr.rel (%p230) target = $region48
        $region47: #{tpu_custom_call.1} parent=43 // pred_region
          %s233 = sand.u32 %s67, 1
          %s234 = scalar_lea.sflag [#allocation5], %s233
          %s235 = sand.u32 %s67, 1
          %s236 = scalar_lea.vmem [#allocation6], %s235
          %238 = dma.done %s234, 16
        $region48: #{tpu_custom_call.1} parent=43 // pred_fallthru
          _
      $region44: #{tpu_custom_call.1} parent=5 // pred_fallthru
        _
    $region6: #{tpu_custom_call.1} parent=1 // loop_footer
      %s17 = sadd.s32 1, %s13
    $region7: #{tpu_custom_call.1} parent=1 // loop_footer_branch
      %12 = sbr.rel target = $region3
    $region8: #{tpu_custom_call.1} parent=1 // loop_exit
      _
    %239 = vsyncpa [#allocation4], 1
    %s240 = scalar_lea.sflag [#allocation4], 1
    %241 = vsyncpa %s240, 1
    %242 = vsyncpa [#allocation5], 1
    %s243 = scalar_lea.sflag [#allocation5], 1
    %244 = vsyncpa %s243, 1

</llo_original>
